<compile_context>
chip_gen: v6e
topology: v6e:2x2x1
jax: 0.10.0
libtpu: 0.0.40
codegen_flags: <defaults>
</compile_context>

<pallas_src>
import functools

import numpy as np
import jax
import jax.numpy as jnp
from jax import lax
from jax.experimental import pallas as pl
from jax.experimental.pallas import tpu as pltpu


def _hawkes_kernel(obs_ref, beta_ref, alpha_ref, mu0_ref,
                   loglik_ref, lams1_ref, carry_ref, *, n_total):
    i = pl.program_id(0)
    obs = obs_ref[...]        # [K, T] f32 (tail of the last tile may be garbage)
    beta = beta_ref[...]      # [K, 1]
    alpha = alpha_ref[...]    # [K, K]
    mu0 = mu0_ref[...]        # [K, 1]
    K, T = obs.shape

    @pl.when(i == 0)
    def _():
        carry_ref[...] = jnp.zeros_like(carry_ref)     # S[:, 0] = 0 (no history)
        loglik_ref[...] = jnp.zeros_like(loglik_ref)

    carry = carry_ref[...]                             # S at global time i*T

    # Hoisted once (JAX does not CSE broadcast_in_dim); reused by every shift,
    # the exclusive multiplier, and the validity mask.
    lane = lax.broadcasted_iota(jnp.int32, (K, T), 1)  # local time index [K, T]

    a = jnp.exp(-beta)                                 # per-step decay, [K, 1]
    B = (a * beta) * obs                               # affine offsets,  [K, T]

    # Hillis-Steele inclusive scan of x -> a*x + B_t along lanes.  The decay is
    # time-invariant, so only B is scanned; a_d tracks the scalar power a^(2^k).
    a_d = a
    d = 1
    while d < T:                                       # log2(T) unrolled steps
        B_sh = jnp.where(lane < d, 0.0, pltpu.roll(B, shift=d, axis=1))
        B = a_d * B_sh + B                             # compose with left segment
        a_d = a_d * a_d
        d *= 2

    # Exclusive decay multiplier A_ex[:, t] = exp(-t*Beta) = a^t (one EUP exp).
    # Underflow to 0 for large t*Beta is the mathematically correct limit.
    A_ex = jnp.exp(-beta * lane.astype(jnp.float32))   # [K, T]
    B_ex = jnp.where(lane < 1, 0.0, pltpu.roll(B, shift=1, axis=1))
    S = A_ex * carry + B_ex                            # history sum before each t

    # Carry across tiles: S[(i+1)*T] = a^T * S[i*T] + B_inc[:, T-1].
    # NOTE: in the ragged last tile this absorbs garbage columns, but the carry
    # is never read again after the final grid step.
    carry_ref[...] = (A_ex[:, T - 1:T] * a) * carry + B[:, T - 1:T]

    # lam_pre[:, t] = Alpha @ S[:, t] (MXU).  Garbage in ragged S columns stays
    # column-local through the contraction, so valid columns are unaffected.
    pre = jnp.dot(alpha, S, preferred_element_type=jnp.float32)    # [K, T]

    # softplus with threshold=20 (torch.nn.functional.softplus default).
    sp = jnp.where(pre > 20.0, pre,
                   jnp.log(1.0 + jnp.exp(jnp.minimum(pre, 20.0))))

    col = lane + i * T                                 # global time index
    valid = col < n_total
    lams1 = jnp.where(col == 0, 0.0, sp)               # t = 0 -> zeros (PyTorch)
    lams1 = jnp.where(valid, lams1, 0.0)               # mask ragged tail
    lams1_ref[...] = lams1

    # Per-row log-likelihood partial (lams0 == broadcast(mu0)); lane reduce only,
    # the sublane/scalar reduce is done once in the wrapper.
    nloglams = obs * jnp.log(mu0 + lams1 + 1e-05)
    diff = jnp.where(valid, nloglams - mu0 - lams1, 0.0)
    loglik_ref[...] += jnp.sum(diff, axis=1, keepdims=True)


def _pow2_floor(x):
    return 1 << (max(int(x), 1).bit_length() - 1)


def hawkes_forward(obs, beta, alpha, *, tile_n=1024):
    """Pallas implementation of TorchHawkes.forward() -> (loglik, lams0, lams1)."""
    obs = obs.astype(jnp.float32)
    K, N = obs.shape
    # Mu0 is derived from obs at __init__ time (glue, plain JAX).
    mu0 = obs.mean(axis=1, keepdims=True) / 10.0 + 0.01            # [K, 1]
    beta2 = beta.astype(jnp.float32).reshape(K, 1)                 # [K, 1]
    alpha = alpha.astype(jnp.float32)                              # [K, K]

    # Lane-dense time tile: as large as the problem / VMEM budget allows (the
    # grid is sequential, so fewer steps = less exposed fixed overhead).  Tiles
    # never exceed N, so raggedness only ever occurs on the genuine last block.
    if N <= 128:
        tile_n = N                                     # single full-extent block
    else:
        tile_n = max(128, min(_pow2_floor(tile_n), _pow2_floor(N)))

    def vmem_need(t):
        io = 2 * 2 * K * t * 4          # double-buffered obs in + lams1 out
        temps = 8 * K * t * 4           # live [K, t] f32 temporaries in the scan
        consts = 2 * (K * K + 3 * K) * 4
        return io + temps + consts

    vmem_budget = 32 * 1024 * 1024      # conservative: fits v7x scoped default
    while tile_n > 128 and vmem_need(tile_n) > vmem_budget:
        tile_n //= 2

    n_blocks = pl.cdiv(N, tile_n)       # ragged last block handled in-kernel
    kernel = functools.partial(_hawkes_kernel, n_total=N)

    grid_spec = pltpu.PrefetchScalarGridSpec(
        num_scalar_prefetch=0,
        grid=(n_blocks,),
        in_specs=[
            pl.BlockSpec((K, tile_n), lambda i: (0, i)),   # obs (time-tiled)
            pl.BlockSpec((K, 1), lambda i: (0, 0)),        # beta
            pl.BlockSpec((K, K), lambda i: (0, 0)),        # alpha
            pl.BlockSpec((K, 1), lambda i: (0, 0)),        # mu0
        ],
        out_specs=[
            pl.BlockSpec((K, 1), lambda i: (0, 0)),        # per-row loglik acc
            pl.BlockSpec((K, tile_n), lambda i: (0, i)),   # lams1 (time-tiled)
        ],
        scratch_shapes=[pltpu.VMEM((K, 1), jnp.float32)],  # Hawkes recursion carry
    )

    log2t = max(1, int(tile_n - 1).bit_length())
    cost = pl.CostEstimate(
        flops=int(2 * K * K * N + (3 * log2t + 30) * K * N),
        transcendentals=int(4 * K * N),       # exp(A_ex) + softplus exp/log + log
        bytes_accessed=int(4 * (2 * K * N + K * K + 4 * K)),
    )

    loglik_rows, lams1 = pl.pallas_call(
        kernel,
        out_shape=(
            jax.ShapeDtypeStruct((K, 1), jnp.float32),
            jax.ShapeDtypeStruct((K, N), jnp.float32),
        ),
        grid_spec=grid_spec,
        compiler_params=pltpu.CompilerParams(
            # Sequential: the O(N) recursion carries state across time tiles.
            # TODO(synk): on v7x a leading core-parallel grid axis could split
            # the Alpha rows across the two TensorCores (needs K % 16 == 0);
            # omitted to keep a single code path across generations.
            dimension_semantics=("arbitrary",),
            vmem_limit_bytes=vmem_budget),
        cost_estimate=cost,
    )(obs, beta2, alpha, mu0)

    loglik = jnp.sum(loglik_rows)                      # final reduce of K partials
    lams0 = jnp.broadcast_to(mu0, (K, N))
    return loglik, lams0, lams1


def _reference(obs, beta, alpha):
    """NumPy (float64) reference mirroring the PyTorch module, for verification."""
    obs = np.asarray(obs, np.float64)
    beta = np.asarray(beta, np.float64)
    alpha = np.asarray(alpha, np.float64)
    K, N = obs.shape
    mu0 = obs.mean(axis=1) / 10.0 + 0.01
    lams0 = np.repeat(mu0[:, None], N, axis=1)
    lams1 = np.zeros((K, N), np.float64)
    for t in range(1, N):
        dt = t - np.arange(t)
        kern = beta[:, None] * np.exp(-dt[None, :] * beta[:, None])   # [K, t]
        lam = (alpha @ (obs[:, :t] * kern)).sum(1)                    # [K]
        lams1[:, t] = np.where(lam > 20.0, lam, np.log1p(np.exp(np.minimum(lam, 20.0))))
    nloglams = obs * np.log(lams0 + lams1 + 1e-05)
    loglik = (nloglams - lams0 - lams1).sum()
    return loglik, lams0, lams1


if __name__ == "__main__":
    # Small: 8 locations, 300 time units -> multiple time tiles (carry tested)
    # and a ragged final tile (masking tested).
    K, N = 8, 300
    key = jax.random.PRNGKey(0)
    k_obs, k_beta, k_alpha = jax.random.split(key, 3)

    # Synthetic event counts + parameter init matching the module __init__.
    obs = jnp.floor(jax.random.uniform(k_obs, (K, N), minval=0.0, maxval=5.0))
    obs = obs.astype(jnp.float32)
    beta = jax.random.uniform(k_beta, (K,), minval=1.0, maxval=3.0)       # U(1,3)
    alpha = jax.random.uniform(k_alpha, (K, K), minval=0.0, maxval=0.01)  # U(0,0.01)

    fwd = jax.jit(hawkes_forward, static_argnames=("tile_n",))

    # Multi-tile path: 3 time tiles (128, 128, ragged 44) -> carry + masking.
    loglik, lams0, lams1 = fwd(obs, beta, alpha, tile_n=128)
    jax.block_until_ready((loglik, lams0, lams1))

    # Default (large-tile) path: clamps to a 256-wide tile for N=300.
    loglik_b, _, lams1_b = fwd(obs, beta, alpha)
    jax.block_until_ready((loglik_b, lams1_b))

    ref_ll, ref_l0, ref_l1 = _reference(obs, beta, alpha)
    assert np.allclose(np.asarray(lams0), ref_l0, rtol=1e-4, atol=1e-4)
    assert np.allclose(np.asarray(lams1), ref_l1, rtol=1e-4, atol=1e-4)
    assert np.allclose(np.asarray(lams1_b), ref_l1, rtol=1e-4, atol=1e-4)
    assert np.allclose(float(loglik), ref_ll, rtol=1e-3, atol=1e-3)
    assert np.allclose(float(loglik_b), ref_ll, rtol=1e-3, atol=1e-3)

    print("KERNEL_OK")
</pallas_src>

<mosaic_0001>
module attributes {stable_mosaic.version = 11 : i64} {
  func.func @_hawkes_kernel(%arg0: i32, %arg1: memref<8x128xf32, #tpu.memory_space<vmem>>, %arg2: memref<8x1xf32, #tpu.memory_space<vmem>>, %arg3: memref<8x8xf32, #tpu.memory_space<vmem>>, %arg4: memref<8x1xf32, #tpu.memory_space<vmem>>, %arg5: memref<8x1xf32, #tpu.memory_space<vmem>>, %arg6: memref<8x128xf32, #tpu.memory_space<vmem>>, %arg7: memref<8x1xf32, #tpu.memory_space<vmem>>) attributes {dimension_semantics = [#tpu.dimension_semantics<arbitrary>], iteration_bounds = array<i64: 3>, scalar_prefetch = 0 : i64, scratch_operands = 1 : i64, tpu.core_type = #tpu.core_type<tc>, window_params = [{transform_indices = @transform_0, window_bounds = array<i64: 8, 128>}, {pipeline_mode = #tpu.pipeline_mode<synchronous>, transform_indices = @transform_1, window_bounds = array<i64: 8, 1>}, {pipeline_mode = #tpu.pipeline_mode<synchronous>, transform_indices = @transform_2, window_bounds = array<i64: 8, 8>}, {pipeline_mode = #tpu.pipeline_mode<synchronous>, transform_indices = @transform_3, window_bounds = array<i64: 8, 1>}, {pipeline_mode = #tpu.pipeline_mode<synchronous>, transform_indices = @transform_4, window_bounds = array<i64: 8, 1>}, {transform_indices = @transform_5, window_bounds = array<i64: 8, 128>}]} {
    %c0 = arith.constant 0 : index
    %c0_0 = arith.constant 0 : index
    %0 = vector.load %arg1[%c0, %c0_0] : memref<8x128xf32, #tpu.memory_space<vmem>>, vector<8x128xf32>
    %c0_1 = arith.constant 0 : index
    %c0_2 = arith.constant 0 : index
    %1 = vector.load %arg2[%c0_1, %c0_2] : memref<8x1xf32, #tpu.memory_space<vmem>>, vector<8x1xf32>
    %c0_3 = arith.constant 0 : index
    %c0_4 = arith.constant 0 : index
    %2 = vector.load %arg3[%c0_3, %c0_4] : memref<8x8xf32, #tpu.memory_space<vmem>>, vector<8x8xf32>
    %c0_5 = arith.constant 0 : index
    %c0_6 = arith.constant 0 : index
    %3 = vector.load %arg4[%c0_5, %c0_6] : memref<8x1xf32, #tpu.memory_space<vmem>>, vector<8x1xf32>
    %c0_i32 = arith.constant 0 : i32
    %4 = arith.cmpi eq, %arg0, %c0_i32 : i32
    %5 = arith.extui %4 : i1 to i32
    %c0_i32_7 = arith.constant 0 : i32
    %6 = arith.cmpi ne, %5, %c0_i32_7 : i32
    scf.if %6 {
      %cst_46 = arith.constant 0.000000e+00 : f32
      %135 = vector.broadcast %cst_46 : f32 to vector<8x1xf32>
      %c0_47 = arith.constant 0 : index
      %c0_48 = arith.constant 0 : index
      %136 = vector.load %arg7[%c0_47, %c0_48] : memref<8x1xf32, #tpu.memory_space<vmem>>, vector<8x1xf32>
      tpu.vector_store %arg7[%c0_47, %c0_48], %135 {strides = array<i32>} : memref<8x1xf32, #tpu.memory_space<vmem>>, vector<8x1xf32>,
      %cst_49 = arith.constant 0.000000e+00 : f32
      %137 = vector.broadcast %cst_49 : f32 to vector<8x1xf32>
      %c0_50 = arith.constant 0 : index
      %c0_51 = arith.constant 0 : index
      %138 = vector.load %arg5[%c0_50, %c0_51] : memref<8x1xf32, #tpu.memory_space<vmem>>, vector<8x1xf32>
      tpu.vector_store %arg5[%c0_50, %c0_51], %137 {strides = array<i32>} : memref<8x1xf32, #tpu.memory_space<vmem>>, vector<8x1xf32>,
    } else {
    }
    %c0_8 = arith.constant 0 : index
    %c0_9 = arith.constant 0 : index
    %7 = vector.load %arg7[%c0_8, %c0_9] : memref<8x1xf32, #tpu.memory_space<vmem>>, vector<8x1xf32>
    %8 = tpu.iota {dimensions = array<i32: 1>} : vector<8x128xi32>
    %cst = arith.constant 0.000000e+00 : f32
    %9 = vector.broadcast %cst : f32 to vector<8x1xf32>
    %10 = arith.subf %9, %1 : vector<8x1xf32>
    %11 = math.exp %10 : vector<8x1xf32>
    %12 = arith.mulf %11, %1 : vector<8x1xf32>
    %13 = vector.broadcast %12 : vector<8x1xf32> to vector<8x128xf32>
    %14 = arith.mulf %13, %0 : vector<8x128xf32>
    %c1_i32 = arith.constant 1 : i32
    %15 = vector.broadcast %c1_i32 : i32 to vector<8x128xi32>
    %16 = arith.cmpi slt, %8, %15 : vector<8x128xi32>
    %c1_i32_10 = arith.constant 1 : i32
    %17 = tpu.dynamic_rotate %14 by %c1_i32_10 dim 1 : vector<8x128xf32>, i32 -> vector<8x128xf32>
    %cst_11 = arith.constant 0.000000e+00 : f32
    %18 = vector.broadcast %cst_11 : f32 to vector<8x128xf32>
    %19 = arith.select %16, %18, %17 : vector<8x128xi1>, vector<8x128xf32>
    %20 = vector.broadcast %11 : vector<8x1xf32> to vector<8x128xf32>
    %21 = arith.mulf %20, %19 : vector<8x128xf32>
    %22 = arith.addf %21, %14 : vector<8x128xf32>
    %23 = arith.mulf %11, %11 : vector<8x1xf32>
    %c2_i32 = arith.constant 2 : i32
    %24 = vector.broadcast %c2_i32 : i32 to vector<8x128xi32>
    %25 = arith.cmpi slt, %8, %24 : vector<8x128xi32>
    %c2_i32_12 = arith.constant 2 : i32
    %26 = tpu.dynamic_rotate %22 by %c2_i32_12 dim 1 : vector<8x128xf32>, i32 -> vector<8x128xf32>
    %cst_13 = arith.constant 0.000000e+00 : f32
    %27 = vector.broadcast %cst_13 : f32 to vector<8x128xf32>
    %28 = arith.select %25, %27, %26 : vector<8x128xi1>, vector<8x128xf32>
    %29 = vector.broadcast %23 : vector<8x1xf32> to vector<8x128xf32>
    %30 = arith.mulf %29, %28 : vector<8x128xf32>
    %31 = arith.addf %30, %22 : vector<8x128xf32>
    %32 = arith.mulf %23, %23 : vector<8x1xf32>
    %c4_i32 = arith.constant 4 : i32
    %33 = vector.broadcast %c4_i32 : i32 to vector<8x128xi32>
    %34 = arith.cmpi slt, %8, %33 : vector<8x128xi32>
    %c4_i32_14 = arith.constant 4 : i32
    %35 = tpu.dynamic_rotate %31 by %c4_i32_14 dim 1 : vector<8x128xf32>, i32 -> vector<8x128xf32>
    %cst_15 = arith.constant 0.000000e+00 : f32
    %36 = vector.broadcast %cst_15 : f32 to vector<8x128xf32>
    %37 = arith.select %34, %36, %35 : vector<8x128xi1>, vector<8x128xf32>
    %38 = vector.broadcast %32 : vector<8x1xf32> to vector<8x128xf32>
    %39 = arith.mulf %38, %37 : vector<8x128xf32>
    %40 = arith.addf %39, %31 : vector<8x128xf32>
    %41 = arith.mulf %32, %32 : vector<8x1xf32>
    %c8_i32 = arith.constant 8 : i32
    %42 = vector.broadcast %c8_i32 : i32 to vector<8x128xi32>
    %43 = arith.cmpi slt, %8, %42 : vector<8x128xi32>
    %c8_i32_16 = arith.constant 8 : i32
    %44 = tpu.dynamic_rotate %40 by %c8_i32_16 dim 1 : vector<8x128xf32>, i32 -> vector<8x128xf32>
    %cst_17 = arith.constant 0.000000e+00 : f32
    %45 = vector.broadcast %cst_17 : f32 to vector<8x128xf32>
    %46 = arith.select %43, %45, %44 : vector<8x128xi1>, vector<8x128xf32>
    %47 = vector.broadcast %41 : vector<8x1xf32> to vector<8x128xf32>
    %48 = arith.mulf %47, %46 : vector<8x128xf32>
    %49 = arith.addf %48, %40 : vector<8x128xf32>
    %50 = arith.mulf %41, %41 : vector<8x1xf32>
    %c16_i32 = arith.constant 16 : i32
    %51 = vector.broadcast %c16_i32 : i32 to vector<8x128xi32>
    %52 = arith.cmpi slt, %8, %51 : vector<8x128xi32>
    %c16_i32_18 = arith.constant 16 : i32
    %53 = tpu.dynamic_rotate %49 by %c16_i32_18 dim 1 : vector<8x128xf32>, i32 -> vector<8x128xf32>
    %cst_19 = arith.constant 0.000000e+00 : f32
    %54 = vector.broadcast %cst_19 : f32 to vector<8x128xf32>
    %55 = arith.select %52, %54, %53 : vector<8x128xi1>, vector<8x128xf32>
    %56 = vector.broadcast %50 : vector<8x1xf32> to vector<8x128xf32>
    %57 = arith.mulf %56, %55 : vector<8x128xf32>
    %58 = arith.addf %57, %49 : vector<8x128xf32>
    %59 = arith.mulf %50, %50 : vector<8x1xf32>
    %c32_i32 = arith.constant 32 : i32
    %60 = vector.broadcast %c32_i32 : i32 to vector<8x128xi32>
    %61 = arith.cmpi slt, %8, %60 : vector<8x128xi32>
    %c32_i32_20 = arith.constant 32 : i32
    %62 = tpu.dynamic_rotate %58 by %c32_i32_20 dim 1 : vector<8x128xf32>, i32 -> vector<8x128xf32>
    %cst_21 = arith.constant 0.000000e+00 : f32
    %63 = vector.broadcast %cst_21 : f32 to vector<8x128xf32>
    %64 = arith.select %61, %63, %62 : vector<8x128xi1>, vector<8x128xf32>
    %65 = vector.broadcast %59 : vector<8x1xf32> to vector<8x128xf32>
    %66 = arith.mulf %65, %64 : vector<8x128xf32>
    %67 = arith.addf %66, %58 : vector<8x128xf32>
    %68 = arith.mulf %59, %59 : vector<8x1xf32>
    %c64_i32 = arith.constant 64 : i32
    %69 = vector.broadcast %c64_i32 : i32 to vector<8x128xi32>
    %70 = arith.cmpi slt, %8, %69 : vector<8x128xi32>
    %c64_i32_22 = arith.constant 64 : i32
    %71 = tpu.dynamic_rotate %67 by %c64_i32_22 dim 1 : vector<8x128xf32>, i32 -> vector<8x128xf32>
    %cst_23 = arith.constant 0.000000e+00 : f32
    %72 = vector.broadcast %cst_23 : f32 to vector<8x128xf32>
    %73 = arith.select %70, %72, %71 : vector<8x128xi1>, vector<8x128xf32>
    %74 = vector.broadcast %68 : vector<8x1xf32> to vector<8x128xf32>
    %75 = arith.mulf %74, %73 : vector<8x128xf32>
    %76 = arith.addf %75, %67 : vector<8x128xf32>
    %cst_24 = arith.constant 0.000000e+00 : f32
    %77 = vector.broadcast %cst_24 : f32 to vector<8x1xf32>
    %78 = arith.subf %77, %1 : vector<8x1xf32>
    %79 = arith.sitofp %8 : vector<8x128xi32> to vector<8x128xf32>
    %80 = vector.broadcast %78 : vector<8x1xf32> to vector<8x128xf32>
    %81 = arith.mulf %80, %79 : vector<8x128xf32>
    %82 = math.exp %81 : vector<8x128xf32>
    %c1_i32_25 = arith.constant 1 : i32
    %83 = vector.broadcast %c1_i32_25 : i32 to vector<8x128xi32>
    %84 = arith.cmpi slt, %8, %83 : vector<8x128xi32>
    %c1_i32_26 = arith.constant 1 : i32
    %85 = tpu.dynamic_rotate %76 by %c1_i32_26 dim 1 : vector<8x128xf32>, i32 -> vector<8x128xf32>
    %cst_27 = arith.constant 0.000000e+00 : f32
    %86 = vector.broadcast %cst_27 : f32 to vector<8x128xf32>
    %87 = arith.select %84, %86, %85 : vector<8x128xi1>, vector<8x128xf32>
    %88 = vector.broadcast %7 : vector<8x1xf32> to vector<8x128xf32>
    %89 = arith.mulf %82, %88 : vector<8x128xf32>
    %90 = arith.addf %89, %87 : vector<8x128xf32>
    %91 = vector.extract_strided_slice %82 {offsets = [0, 127], sizes = [8, 1], strides = [1, 1]} : vector<8x128xf32> to vector<8x1xf32>
    %92 = arith.mulf %91, %11 : vector<8x1xf32>
    %93 = arith.mulf %92, %7 : vector<8x1xf32>
    %94 = vector.extract_strided_slice %76 {offsets = [0, 127], sizes = [8, 1], strides = [1, 1]} : vector<8x128xf32> to vector<8x1xf32>
    %95 = arith.addf %93, %94 : vector<8x1xf32>
    %c0_28 = arith.constant 0 : index
    %c0_29 = arith.constant 0 : index
    %96 = vector.load %arg7[%c0_28, %c0_29] : memref<8x1xf32, #tpu.memory_space<vmem>>, vector<8x1xf32>
    tpu.vector_store %arg7[%c0_28, %c0_29], %95 {strides = array<i32>} : memref<8x1xf32, #tpu.memory_space<vmem>>, vector<8x1xf32>,
    %cst_30 = arith.constant dense<0.000000e+00> : vector<8x128xf32>
    %97 = tpu.matmul %2, %90, %cst_30 {dimension_numbers = #tpu.dot_dimension_numbers<[1], [0], [0], [1], [0, 0, 1, 1], [], []>} : vector<8x8xf32>, vector<8x128xf32>, vector<8x128xf32> -> vector<8x128xf32>
    %cst_31 = arith.constant 2.000000e+01 : f32
    %98 = vector.broadcast %cst_31 : f32 to vector<8x128xf32>
    %99 = arith.cmpf ogt, %97, %98 : vector<8x128xf32>
    %cst_32 = arith.constant 2.000000e+01 : f32
    %100 = vector.broadcast %cst_32 : f32 to vector<8x128xf32>
    %101 = arith.minimumf %97, %100 : vector<8x128xf32>
    %102 = math.exp %101 : vector<8x128xf32>
    %cst_33 = arith.constant 1.000000e+00 : f32
    %103 = vector.broadcast %cst_33 : f32 to vector<8x128xf32>
    %104 = arith.addf %103, %102 : vector<8x128xf32>
    %105 = math.log %104 : vector<8x128xf32>
    %106 = arith.select %99, %97, %105 : vector<8x128xi1>, vector<8x128xf32>
    %c128_i32 = arith.constant 128 : i32
    %107 = arith.muli %arg0, %c128_i32 : i32
    %108 = vector.broadcast %107 : i32 to vector<8x128xi32>
    %109 = arith.addi %8, %108 : vector<8x128xi32>
    %c300_i32 = arith.constant 300 : i32
    %110 = vector.broadcast %c300_i32 : i32 to vector<8x128xi32>
    %111 = arith.cmpi slt, %109, %110 : vector<8x128xi32>
    %c0_i32_34 = arith.constant 0 : i32
    %112 = vector.broadcast %c0_i32_34 : i32 to vector<8x128xi32>
    %113 = arith.cmpi eq, %109, %112 : vector<8x128xi32>
    %cst_35 = arith.constant 0.000000e+00 : f32
    %114 = vector.broadcast %cst_35 : f32 to vector<8x128xf32>
    %115 = arith.select %113, %114, %106 : vector<8x128xi1>, vector<8x128xf32>
    %cst_36 = arith.constant 0.000000e+00 : f32
    %116 = vector.broadcast %cst_36 : f32 to vector<8x128xf32>
    %117 = arith.select %111, %115, %116 : vector<8x128xi1>, vector<8x128xf32>
    %c0_37 = arith.constant 0 : index
    %c0_38 = arith.constant 0 : index
    %118 = vector.load %arg6[%c0_37, %c0_38] : memref<8x128xf32, #tpu.memory_space<vmem>>, vector<8x128xf32>
    tpu.vector_store %arg6[%c0_37, %c0_38], %117 {strides = array<i32>} : memref<8x128xf32, #tpu.memory_space<vmem>>, vector<8x128xf32>,
    %119 = vector.broadcast %3 : vector<8x1xf32> to vector<8x128xf32>
    %120 = arith.addf %119, %117 : vector<8x128xf32>
    %cst_39 = arith.constant 9.99999974E-6 : f32
    %121 = vector.broadcast %cst_39 : f32 to vector<8x128xf32>
    %122 = arith.addf %120, %121 : vector<8x128xf32>
    %123 = math.log %122 : vector<8x128xf32>
    %124 = arith.mulf %0, %123 : vector<8x128xf32>
    %125 = vector.broadcast %3 : vector<8x1xf32> to vector<8x128xf32>
    %126 = arith.subf %124, %125 : vector<8x128xf32>
    %127 = arith.subf %126, %117 : vector<8x128xf32>
    %cst_40 = arith.constant 0.000000e+00 : f32
    %128 = vector.broadcast %cst_40 : f32 to vector<8x128xf32>
    %129 = arith.select %111, %127, %128 : vector<8x128xi1>, vector<8x128xf32>
    %c0_41 = arith.constant 0 : index
    %c0_42 = arith.constant 0 : index
    %130 = vector.load %arg5[%c0_41, %c0_42] : memref<8x1xf32, #tpu.memory_space<vmem>>, vector<8x1xf32>
    %cst_43 = arith.constant dense<0.000000e+00> : vector<8xf32>
    %131 = vector.multi_reduction <add>, %129, %cst_43 [1] : vector<8x128xf32> to vector<8xf32>
    %132 = vector.shape_cast %131 : vector<8xf32> to vector<8x1xf32>
    %133 = arith.addf %130, %132 : vector<8x1xf32>
    %c0_44 = arith.constant 0 : index
    %c0_45 = arith.constant 0 : index
    %134 = vector.load %arg5[%c0_44, %c0_45] : memref<8x1xf32, #tpu.memory_space<vmem>>, vector<8x1xf32>
    tpu.vector_store %arg5[%c0_44, %c0_45], %133 {strides = array<i32>} : memref<8x1xf32, #tpu.memory_space<vmem>>, vector<8x1xf32>,
    return
  }
  func.func @transform_0(%arg0: i32) -> (i32, i32) {
    %c0_i32 = arith.constant 0 : i32
    %c0_i32_0 = arith.constant 0 : i32
    return %c0_i32, %arg0 : i32, i32
  }
  func.func @transform_1(%arg0: i32) -> (i32, i32) {
    %c0_i32 = arith.constant 0 : i32
    %c0_i32_0 = arith.constant 0 : i32
    %c0_i32_1 = arith.constant 0 : i32
    return %c0_i32, %c0_i32_0 : i32, i32
  }
  func.func @transform_2(%arg0: i32) -> (i32, i32) {
    %c0_i32 = arith.constant 0 : i32
    %c0_i32_0 = arith.constant 0 : i32
    %c0_i32_1 = arith.constant 0 : i32
    return %c0_i32, %c0_i32_0 : i32, i32
  }
  func.func @transform_3(%arg0: i32) -> (i32, i32) {
    %c0_i32 = arith.constant 0 : i32
    %c0_i32_0 = arith.constant 0 : i32
    %c0_i32_1 = arith.constant 0 : i32
    return %c0_i32, %c0_i32_0 : i32, i32
  }
  func.func @transform_4(%arg0: i32) -> (i32, i32) {
    %c0_i32 = arith.constant 0 : i32
    %c0_i32_0 = arith.constant 0 : i32
    %c0_i32_1 = arith.constant 0 : i32
    return %c0_i32, %c0_i32_0 : i32, i32
  }
  func.func @transform_5(%arg0: i32) -> (i32, i32) {
    %c0_i32 = arith.constant 0 : i32
    %c0_i32_0 = arith.constant 0 : i32
    return %c0_i32, %arg0 : i32, i32
  }
}

</mosaic_0001>

<llo_original>
// kernel: hawkes_forward.1
$region0: #{hawkes_forward.1}
  #allocation0 [shape = 'u32[]', space=smem, size = 0x4, offset = 0x4, fixed_abs, tag = 'smem constant byte address 0x4 - core index']
  #allocation1 [shape = 'u32[144,128]{1,0:T(1,128)}', space=vmem, size = 0x12000, scoped, tag = 'internal scratch']
  #allocation2 [shape = 'f32[8,1]{1,0:T(8,128)}', space=vmem, size = 0x1000, scoped, tag = 'scratch operand']
  %s0 = inlined_call_operand.vmem [shape: f32[8,300], index: 0, kind: input, shape index: {}]
  %s1 = inlined_call_operand.vmem [shape: f32[8,1], index: 1, kind: input, shape index: {}]
  %s2 = inlined_call_operand.vmem [shape: f32[8,8], index: 2, kind: input, shape index: {}]
  %s3 = inlined_call_operand.vmem [shape: f32[8,1], index: 3, kind: input, shape index: {}]
  %s4 = inlined_call_operand.vmem [shape: f32[8,1], index: 4, kind: output, shape index: {0}]
  %s5 = inlined_call_operand.hbm [shape: f32[8,300], index: 5, kind: output, shape index: {1}]
  %6 = xla_tuple %s4, %s5
  %s7 = sld [smem:[#allocation0]]
  $region61: #{hawkes_forward.1} parent=0
    _
  %s9 = ssub.s32 1, %s7
  %s10 = scalar_select 0, %s9, %s7
  $region1: #{hawkes_forward.1} parent=0
    #allocation3 [shape = 'u8[8192]{0}', space=vmem, size = 0x2000, scoped, tag = 'output window, operand 1']
    #allocation4 [shape = 's32[2]{0}', space=sflag, size = 0x8, scoped, tag = 'scoped memory for hawkes_forward.1']
    %11 = vsyncpa [#allocation4], 0
    %s12 = scalar_lea.sflag [#allocation4], 1
    %13 = vsyncpa %s12, 0
    loop: start=0, step=1, limit=5
    $region2: #{hawkes_forward.1} parent=1 // loop_pre_header
      _
    $region3: #{hawkes_forward.1} parent=1 // loop_header
      %s15 = sphi 0, %s19
      %p16 = scmp.ge.s32.totalorder %s15, 5
      %s25 = sphi 0, %s27
      %s28 = sphi 0, %s25
      %s29 = sphi 0, %s28
      %s45 = sphi 0, %s29
      %s49 = sphi 0, %s49
      %s51 = sphi 0, %s49
      %s52 = sphi 0, %s51
      %s66 = sphi 0, %s52
      %s70 = sphi 0, %s70
      %s72 = sphi 0, %s70
      %s73 = sphi 0, %s72
      %s87 = sphi 0, %s73
      %s91 = sphi 0, %s91
      %s93 = sphi 0, %s91
      %s94 = sphi 0, %s93
      %s108 = sphi 0, %s94
      %s112 = sphi 0, %s112
      %s114 = sphi 0, %s112
      %s115 = sphi 0, %s114
      %s129 = sphi 0, %s115
      %s135 = sphi 0, %s137
      %s138 = sphi 0, %s135
      %s139 = sphi 0, %s138
      %s155 = sphi 0, %s139
    $region4: #{hawkes_forward.1} parent=1 // loop_header_branch
      %18 = sbr.rel (%p16) target = $region8
    $region5: #{hawkes_forward.1} parent=1 // loop_body
      %s20 = ssub.s32 %s15, 1
      %s21 = ssub.s32 %s15, 2
      %s22 = sadd.s32 %s15, 1
      %s23 = ssub.s32 %s15, %s22
      %p24 = scmp.eq.s32.totalorder %s23, 0
      %s26 = sadd.s32 %s25, 1
      %s27 = scalar_select %p24, %s25, %s26
      %p30 = pneg %p24
      %p31 = scmp.eq.s32.totalorder %s15, 2
      %p32 = por %p30, %p31
      %p33 = scmp.ne.s32.totalorder %s25, %s28
      %p34 = scmp.eq.s32.totalorder %s15, 0
      %p35 = por %p33, %p34
      %p36 = scmp.ne.s32.totalorder %s25, %s28
      %p37 = scmp.eq.s32.totalorder %s20, 2
      %p38 = por %p36, %p37
      %p39 = scmp.ne.s32.totalorder %s28, %s29
      %p40 = scmp.eq.s32.totalorder %s20, 0
      %p41 = por %p39, %p40
      %p42 = scmp.ne.s32.totalorder %s28, %s29
      %p43 = scmp.eq.s32.totalorder %s21, 2
      %p44 = por %p42, %p43
      %p46 = scmp.ne.s32.totalorder %s29, %s45
      %p47 = scmp.eq.s32.totalorder %s21, 0
      %p48 = por %p46, %p47
      %s50 = sadd.s32 %s49, 1
      %p53 = scmp.eq.s32.totalorder %s15, 2
      %p54 = scmp.ne.s32.totalorder %s49, %s51
      %p55 = scmp.eq.s32.totalorder %s15, 0
      %p56 = por %p54, %p55
      %p57 = scmp.ne.s32.totalorder %s49, %s51
      %p58 = scmp.eq.s32.totalorder %s20, 2
      %p59 = por %p57, %p58
      %p60 = scmp.ne.s32.totalorder %s51, %s52
      %p61 = scmp.eq.s32.totalorder %s20, 0
      %p62 = por %p60, %p61
      %p63 = scmp.ne.s32.totalorder %s51, %s52
      %p64 = scmp.eq.s32.totalorder %s21, 2
      %p65 = por %p63, %p64
      %p67 = scmp.ne.s32.totalorder %s52, %s66
      %p68 = scmp.eq.s32.totalorder %s21, 0
      %p69 = por %p67, %p68
      %s71 = sadd.s32 %s70, 1
      %p74 = scmp.eq.s32.totalorder %s15, 2
      %p75 = scmp.ne.s32.totalorder %s70, %s72
      %p76 = scmp.eq.s32.totalorder %s15, 0
      %p77 = por %p75, %p76
      %p78 = scmp.ne.s32.totalorder %s70, %s72
      %p79 = scmp.eq.s32.totalorder %s20, 2
      %p80 = por %p78, %p79
      %p81 = scmp.ne.s32.totalorder %s72, %s73
      %p82 = scmp.eq.s32.totalorder %s20, 0
      %p83 = por %p81, %p82
      %p84 = scmp.ne.s32.totalorder %s72, %s73
      %p85 = scmp.eq.s32.totalorder %s21, 2
      %p86 = por %p84, %p85
      %p88 = scmp.ne.s32.totalorder %s73, %s87
      %p89 = scmp.eq.s32.totalorder %s21, 0
      %p90 = por %p88, %p89
      %s92 = sadd.s32 %s91, 1
      %p95 = scmp.eq.s32.totalorder %s15, 2
      %p96 = scmp.ne.s32.totalorder %s91, %s93
      %p97 = scmp.eq.s32.totalorder %s15, 0
      %p98 = por %p96, %p97
      %p99 = scmp.ne.s32.totalorder %s91, %s93
      %p100 = scmp.eq.s32.totalorder %s20, 2
      %p101 = por %p99, %p100
      %p102 = scmp.ne.s32.totalorder %s93, %s94
      %p103 = scmp.eq.s32.totalorder %s20, 0
      %p104 = por %p102, %p103
      %p105 = scmp.ne.s32.totalorder %s93, %s94
      %p106 = scmp.eq.s32.totalorder %s21, 2
      %p107 = por %p105, %p106
      %p109 = scmp.ne.s32.totalorder %s94, %s108
      %p110 = scmp.eq.s32.totalorder %s21, 0
      %p111 = por %p109, %p110
      %s113 = sadd.s32 %s112, 1
      %p116 = scmp.eq.s32.totalorder %s15, 2
      %p117 = scmp.ne.s32.totalorder %s112, %s114
      %p118 = scmp.eq.s32.totalorder %s15, 0
      %p119 = por %p117, %p118
      %p120 = scmp.ne.s32.totalorder %s112, %s114
      %p121 = scmp.eq.s32.totalorder %s20, 2
      %p122 = por %p120, %p121
      %p123 = scmp.ne.s32.totalorder %s114, %s115
      %p124 = scmp.eq.s32.totalorder %s20, 0
      %p125 = por %p123, %p124
      %p126 = scmp.ne.s32.totalorder %s114, %s115
      %p127 = scmp.eq.s32.totalorder %s21, 2
      %p128 = por %p126, %p127
      %p130 = scmp.ne.s32.totalorder %s115, %s129
      %p131 = scmp.eq.s32.totalorder %s21, 0
      %p132 = por %p130, %p131
      %s133 = ssub.s32 %s15, %s22
      %p134 = scmp.eq.s32.totalorder %s133, 0
      %s136 = sadd.s32 %s135, 1
      %s137 = scalar_select %p134, %s135, %s136
      %p140 = pneg %p134
      %p141 = scmp.eq.s32.totalorder %s15, 2
      %p142 = por %p140, %p141
      %p143 = scmp.ne.s32.totalorder %s135, %s138
      %p144 = scmp.eq.s32.totalorder %s15, 0
      %p145 = por %p143, %p144
      %p146 = scmp.ne.s32.totalorder %s135, %s138
      %p147 = scmp.eq.s32.totalorder %s20, 2
      %p148 = por %p146, %p147
      %p149 = scmp.ne.s32.totalorder %s138, %s139
      %p150 = scmp.eq.s32.totalorder %s20, 0
      %p151 = por %p149, %p150
      %p152 = scmp.ne.s32.totalorder %s138, %s139
      %p153 = scmp.eq.s32.totalorder %s21, 2
      %p154 = por %p152, %p153
      %p156 = scmp.ne.s32.totalorder %s139, %s155
      %p157 = scmp.eq.s32.totalorder %s21, 0
      %p158 = por %p156, %p157
      %p159 = scmp.le.s32.totalorder 1, %s15
      %p160 = scmp.lt.s32.totalorder %s15, 4
      %p161 = pnand %p159, %p160
      %p162 = pneg %p161
      // Predicated region
      $region9: #{hawkes_forward.1} parent=5 // pred_check
        _
      $region10: #{hawkes_forward.1} parent=5 // pred_check_branch
        %164 = sbr.rel (%p161) target = $region12
      $region11: #{hawkes_forward.1} parent=5 // pred_region
        %s165 = ssub.s32 %s15, 1
        // Predicated region
        $region13: #{hawkes_forward.1} parent=11 // pred_check
          %p166 = pneg %p62
        $region14: #{hawkes_forward.1} parent=11 // pred_check_branch
          %168 = sbr.rel (%p166) target = $region16
        $region15: #{hawkes_forward.1} parent=11 // pred_region
          _
        $region16: #{hawkes_forward.1} parent=11 // pred_fallthru
          _
        // Predicated region
        $region17: #{hawkes_forward.1} parent=11 // pred_check
          %p169 = pneg %p83
        $region18: #{hawkes_forward.1} parent=11 // pred_check_branch
          %171 = sbr.rel (%p169) target = $region20
        $region19: #{hawkes_forward.1} parent=11 // pred_region
          _
        $region20: #{hawkes_forward.1} parent=11 // pred_fallthru
          _
        // Predicated region
        $region21: #{hawkes_forward.1} parent=11 // pred_check
          %p172 = pneg %p104
        $region22: #{hawkes_forward.1} parent=11 // pred_check_branch
          %174 = sbr.rel (%p172) target = $region24
        $region23: #{hawkes_forward.1} parent=11 // pred_region
          _
        $region24: #{hawkes_forward.1} parent=11 // pred_fallthru
          _
      $region12: #{hawkes_forward.1} parent=5 // pred_fallthru
        _
      %p175 = scmp.lt.s32.totalorder %s15, 3
      // Predicated region
      $region25: #{hawkes_forward.1} parent=5 // pred_check
        %p176 = pneg %p175
      $region26: #{hawkes_forward.1} parent=5 // pred_check_branch
        %178 = sbr.rel (%p176) target = $region28
      $region27: #{hawkes_forward.1} parent=5 // pred_region
        // Predicated region
        $region29: #{hawkes_forward.1} parent=27 // pred_check
          %p179 = pneg %p35
        $region30: #{hawkes_forward.1} parent=27 // pred_check_branch
          %181 = sbr.rel (%p179) target = $region32
        $region31: #{hawkes_forward.1} parent=27 // pred_region
          %p182 = scmp.lt.s32.totalorder %s15, 2
          %s183 = scalar_select %p182, %s15, 2
          %s184 = smul.addr %s183, 8
          %s185 = scalar_lea.vmem %s0, %s184
        $region32: #{hawkes_forward.1} parent=27 // pred_fallthru
          _
      $region28: #{hawkes_forward.1} parent=5 // pred_fallthru
        _
      %p186 = scmp.le.s32.totalorder 1, %s15
      %p187 = scmp.lt.s32.totalorder %s15, 4
      %p188 = pnand %p186, %p187
      %p189 = pneg %p188
      // Predicated region
      $region33: #{hawkes_forward.1} parent=5 // pred_check
        _
      $region34: #{hawkes_forward.1} parent=5 // pred_check_branch
        %191 = sbr.rel (%p188) target = $region36
      $region35: #{hawkes_forward.1} parent=5 // pred_region
        %s192 = ssub.s32 %s15, 1
        %p193 = scmp.lt.s32.totalorder %s20, 2
        %s194 = scalar_select %p193, %s20, 2
        %s195 = smul.addr %s194, 8
        %s196 = scalar_lea.vmem %s0, %s195
        %p197 = pneg %p41
        %p198 = pneg %p38
        %p199 = pneg %p62
        %p200 = pneg %p59
        %p201 = pneg %p83
        %p202 = pneg %p80
        %p203 = pneg %p104
        %p204 = pneg %p101
        %p205 = pneg %p125
        %p206 = pneg %p122
        %p207 = pneg %p151
        %p208 = pneg %p148
        %s209 = sand.u32 %s138, 1
        %s210 = scalar_lea.sflag [#allocation4], %s209
        %s211 = sand.u32 %s138, 1
        %s212 = smul.addr %s211, 8
        %s213 = scalar_lea.vmem [#allocation3], %s212
        %p214 = scmp.lt.s32.totalorder %s20, 2
        %s215 = scalar_select %p214, %s20, 2
        %s216 = smul.addr %s215, 8
        %s217 = scalar_lea.vmem %s0, %s216
        %v218 = vld [vmem:[%s217] sm:$0xff]
        %v219 = vld [vmem:[%s1] sm:$0xff]
        %v220 = vld [vmem:[%s2] sm:$0xff]
        %v221 = vld [vmem:[%s3] sm:$0xff]
        %p222 = scmp.eq.s32.totalorder %s20, 0
        // Predicated region
        $region37: #{hawkes_forward.1} parent=35 // pred_check
          %p223 = pneg %p222
        $region38: #{hawkes_forward.1} parent=35 // pred_check_branch
          %225 = sbr.rel (%p223) target = $region40
        $region39: #{hawkes_forward.1} parent=35 // pred_region
          %vm226 = vcmask 7168
          %227 = vst.msk [vmem:[#allocation2] sm:$0xff] %vm226, 0.0
          %228 = vst.msk [vmem:[%s4] sm:$0xff] %vm226, 0.0
        $region40: #{hawkes_forward.1} parent=35 // pred_fallthru
          _
        %v229 = vld [vmem:[#allocation2] sm:$0xff]
        %v230 = vlaneseq
        %v231 = vand.u32 %v230, 127
        %v232 = vsub.f32 0.0, %v219
        %v233 = vmul.f32 %v232, 1.442695
        %v234 = vpow.pop %v233
        %v235 = vmul.f32 %v234, %v219
        %237 = vset.pattern.permute.xlu0 0
        %238 = vperm.xlu0 %237, %v235
        %v239 = vpop.permute.xlu0 %238
        %v241 = vmul.f32 %v239, %v218
        %vm242 = vcmp.lt.s32.totalorder %v231, 1
        %243 = vrot.lane.b32.xlu0 %v241, 1
        %v244 = vpop.permute.xlu0 %243
        %v245 = vsel %vm242, 0.0, %v244
        %247 = vset.pattern.permute.xlu0 0
        %248 = vperm.xlu0 %247, %v234
        %v249 = vpop.permute.xlu0 %248
        %v251 = vmul.f32 %v249, %v245
        %v252 = vadd.f32 %v251, %v241
        %v253 = vmul.f32 %v234, %v234
        %vm254 = vcmp.lt.s32.totalorder %v231, 2
        %255 = vrot.lane.b32.xlu0 %v252, 2
        %v256 = vpop.permute.xlu0 %255
        %v257 = vsel %vm254, 0.0, %v256
        %259 = vset.pattern.permute.xlu0 0
        %260 = vperm.xlu0 %259, %v253
        %v261 = vpop.permute.xlu0 %260
        %v263 = vmul.f32 %v261, %v257
        %v264 = vadd.f32 %v263, %v252
        %v265 = vmul.f32 %v253, %v253
        %vm266 = vcmp.lt.s32.totalorder %v231, 4
        %267 = vrot.lane.b32.xlu0 %v264, 4
        %v268 = vpop.permute.xlu0 %267
        %v269 = vsel %vm266, 0.0, %v268
        %271 = vset.pattern.permute.xlu0 0
        %272 = vperm.xlu0 %271, %v265
        %v273 = vpop.permute.xlu0 %272
        %v275 = vmul.f32 %v273, %v269
        %v276 = vadd.f32 %v275, %v264
        %v277 = vmul.f32 %v265, %v265
        %vm278 = vcmp.lt.s32.totalorder %v231, 8
        %279 = vrot.lane.b32.xlu0 %v276, 8
        %v280 = vpop.permute.xlu0 %279
        %v281 = vsel %vm278, 0.0, %v280
        %283 = vset.pattern.permute.xlu0 0
        %284 = vperm.xlu0 %283, %v277
        %v285 = vpop.permute.xlu0 %284
        %v287 = vmul.f32 %v285, %v281
        %v288 = vadd.f32 %v287, %v276
        %v289 = vmul.f32 %v277, %v277
        %vm290 = vcmp.lt.s32.totalorder %v231, 16
        %291 = vrot.lane.b32.xlu0 %v288, 16
        %v292 = vpop.permute.xlu0 %291
        %v293 = vsel %vm290, 0.0, %v292
        %295 = vset.pattern.permute.xlu0 0
        %296 = vperm.xlu0 %295, %v289
        %v297 = vpop.permute.xlu0 %296
        %v299 = vmul.f32 %v297, %v293
        %v300 = vadd.f32 %v299, %v288
        %v301 = vmul.f32 %v289, %v289
        %vm302 = vcmp.lt.s32.totalorder %v231, 32
        %303 = vrot.lane.b32.xlu0 %v300, 32
        %v304 = vpop.permute.xlu0 %303
        %v305 = vsel %vm302, 0.0, %v304
        %307 = vset.pattern.permute.xlu0 0
        %308 = vperm.xlu0 %307, %v301
        %v309 = vpop.permute.xlu0 %308
        %v311 = vmul.f32 %v309, %v305
        %v312 = vadd.f32 %v311, %v300
        %v313 = vmul.f32 %v301, %v301
        %vm314 = vcmp.lt.s32.totalorder %v231, 64
        %315 = vrot.lane.b32.xlu0 %v312, 64
        %v316 = vpop.permute.xlu0 %315
        %v317 = vsel %vm314, 0.0, %v316
        %319 = vset.pattern.permute.xlu0 0
        %320 = vperm.xlu0 %319, %v313
        %v321 = vpop.permute.xlu0 %320
        %v323 = vmul.f32 %v321, %v317
        %v324 = vadd.f32 %v323, %v312
        %v325 = vcvt.s32.f32 %v231
        %327 = vset.pattern.permute.xlu0 0
        %328 = vperm.xlu0 %327, %v232
        %v329 = vpop.permute.xlu0 %328
        %v331 = vmul.f32 %v329, %v325
        %v332 = vmul.f32 %v331, 1.442695
        %v333 = vpow.pop %v332
        %334 = vrot.lane.b32.xlu0 %v324, 1
        %v335 = vpop.permute.xlu0 %334
        %v336 = vsel %vm242, 0.0, %v335
        %338 = vset.pattern.permute.xlu0 0
        %339 = vperm.xlu0 %338, %v229
        %v340 = vpop.permute.xlu0 %339
        %v342 = vmul.f32 %v333, %v340
        %v343 = vadd.f32 %v342, %v336
        %344 = vrot.lane.b32.xlu0 %v234, 127
        %v345 = vpop.permute.xlu0 %344
        %v347 = vmul.f32 %v333, %v345
        %348 = vrot.lane.b32.xlu0 %v229, 127
        %v349 = vpop.permute.xlu0 %348
        %v351 = vmul.f32 %v347, %v349
        %v352 = vadd.f32 %v351, %v324
        %354 = vrot.lane.b32.xlu0 %v352, 1
        %v355 = vpop.permute.xlu0 %354
        %vm357 = vcmask 7168
        %358 = vst.msk [vmem:[#allocation2] sm:$0xff] %vm357, %v355
        %vm359 = vcmask 64512
        %v361 = vsel %vm359, %v220, 0
        %363 = vmatprep.subr.mxu0 0.0
        %364 = vmatpush1.msra.mxu0 0.0
        %365 = vmatprep.subr.mxu0 0.0
        %366 = vmatpush1.msra.mxu0 0.0
        %367 = vmatprep.subr.mxu0 0.0
        %368 = vmatpush1.msra.mxu0 0.0
        %369 = vmatprep.subr.mxu0 0.0
        %370 = vmatpush1.msra.mxu0 0.0
        %371 = vmatprep.subr.mxu0 0.0
        %372 = vmatpush1.msra.mxu0 0.0
        %373 = vmatprep.subr.mxu0 0.0
        %374 = vmatpush1.msra.mxu0 0.0
        %375 = vmatprep.subr.mxu0 0.0
        %376 = vmatpush1.msra.mxu0 0.0
        %377 = vmatprep.subr.mxu0 0.0
        %378 = vmatpush1.msra.mxu0 0.0
        %379 = vmatprep.subr.mxu0 0.0
        %380 = vmatpush1.msra.mxu0 0.0
        %381 = vmatprep.subr.mxu0 0.0
        %382 = vmatpush1.msra.mxu0 0.0
        %383 = vmatprep.subr.mxu0 0.0
        %384 = vmatpush1.msra.mxu0 0.0
        %385 = vmatprep.subr.mxu0 0.0
        %386 = vmatpush1.msra.mxu0 0.0
        %387 = vmatprep.subr.mxu0 0.0
        %388 = vmatpush1.msra.mxu0 0.0
        %389 = vmatprep.subr.mxu0 0.0
        %390 = vmatpush1.msra.mxu0 0.0
        %391 = vmatprep.subr.mxu0 0.0
        %392 = vmatpush1.msra.mxu0 0.0
        %393 = vmatprep.subr.mxu0 0.0
        %394 = vmatpush1.msra.mxu0 %v343
        %395 = vmatprep.subr.mxu0 0.0
        %396 = vmatpush2.msra.mxu0 0.0
        %397 = vmatprep.subr.mxu0 0.0
        %398 = vmatpush2.msra.mxu0 0.0
        %399 = vmatprep.subr.mxu0 0.0
        %400 = vmatpush2.msra.mxu0 0.0
        %401 = vmatprep.subr.mxu0 0.0
        %402 = vmatpush2.msra.mxu0 0.0
        %403 = vmatprep.subr.mxu0 0.0
        %404 = vmatpush2.msra.mxu0 0.0
        %405 = vmatprep.subr.mxu0 0.0
        %406 = vmatpush2.msra.mxu0 0.0
        %407 = vmatprep.subr.mxu0 0.0
        %408 = vmatpush2.msra.mxu0 0.0
        %409 = vmatprep.subr.mxu0 0.0
        %410 = vmatpush2.msra.mxu0 0.0
        %411 = vmatprep.subr.mxu0 0.0
        %412 = vmatpush2.msra.mxu0 0.0
        %413 = vmatprep.subr.mxu0 0.0
        %414 = vmatpush2.msra.mxu0 0.0
        %415 = vmatprep.subr.mxu0 0.0
        %416 = vmatpush2.msra.mxu0 0.0
        %417 = vmatprep.subr.mxu0 0.0
        %418 = vmatpush2.msra.mxu0 0.0
        %419 = vmatprep.subr.mxu0 0.0
        %420 = vmatpush2.msra.mxu0 0.0
        %421 = vmatprep.subr.mxu0 0.0
        %422 = vmatpush2.msra.mxu0 0.0
        %423 = vmatprep.subr.mxu0 0.0
        %424 = vmatpush2.msra.mxu0 0.0
        %425 = vmatprep.subr.mxu0 0.0
        %426 = vmatpush2.msra.mxu0 0.0
        %427 = vmatprep.mubr.f32.mxu0 0.0
        %428 = vmatmul.mubr.f32.gmra.mxu0 %v361
        %v429 = vpop.f32.mrf.mxu0
        %v430 = vadd.f32 0.0, %v429
        %v431 = vpop.f32.mrf.mxu0
        %432 = vdwg.mxu0
        %vm433 = vcmp.gt.f32.partialorder %v430, 20.0
        %v434 = vmin.f32 %v430, 20.0
        %v435 = vmul.f32 %v434, 1.442695
        %v436 = vpow.pop %v435
        %v437 = vadd.f32 %v436, 1.0
        %v438 = vlog2.pop %v437
        %v439 = vmul.f32 %v438, 0.6931472
        %v440 = vsel %vm433, %v430, %v439
        %s441 = smul.u32 %s20, 128
        %v442 = vstv %s441
        %v443 = vadd.s32 %v231, %v442
        %vm444 = vcmp.lt.s32.totalorder %v443, 300
        %vm445 = vcmp.eq.s32.totalorder %v443, 0
        %v446 = vsel %vm445, 0.0, %v440
        %v447 = vsel %vm444, %v446, 0.0
        %448 = vst [vmem:[%s213] sm:$0xff] %v447
        %450 = vset.pattern.permute.xlu0 0
        %451 = vperm.xlu0 %450, %v221
        %v452 = vpop.permute.xlu0 %451
        %v454 = vadd.f32 %v452, %v447
        %v455 = vadd.f32 %v454, 1e-05
        %v456 = vlog2.pop %v455
        %v457 = vmul.f32 %v456, 0.6931472
        %v458 = vmul.f32 %v218, %v457
        %v459 = vsub.f32 %v458, %v452
        %v460 = vsub.f32 %v459, %v447
        %v461 = vsel %vm444, %v460, 0.0
        %v462 = vld [vmem:[%s4] sm:$0xff]
        %463 = vadd.xlane.f32.xlu0 %v461
        %v464 = vpop.xlane.xlu0 %463
        %v465 = vadd.f32 %v462, %v464
        %466 = vst.msk [vmem:[%s4] sm:$0xff] %vm357, %v465
        %s467 = sand.u32 %s138, 1
        %s468 = scalar_lea.sflag [#allocation4], %s467
        %s469 = sand.u32 %s138, 1
        %s470 = smul.addr %s469, 8
        %s471 = scalar_lea.vmem [#allocation3], %s470
        // Predicated region
        $region41: #{hawkes_forward.1} parent=35 // pred_check
          %p472 = pneg %p122
        $region42: #{hawkes_forward.1} parent=35 // pred_check_branch
          %474 = sbr.rel (%p472) target = $region44
        $region43: #{hawkes_forward.1} parent=35 // pred_region
          _
        $region44: #{hawkes_forward.1} parent=35 // pred_fallthru
          _
        // Predicated region
        $region45: #{hawkes_forward.1} parent=35 // pred_check
          %p475 = pneg %p148
        $region46: #{hawkes_forward.1} parent=35 // pred_check_branch
          %477 = sbr.rel (%p475) target = $region48
        $region47: #{hawkes_forward.1} parent=35 // pred_region
          %s479 = ssub.s32 128, 128
          %480 = vsyncadd %s468, %s479
          %s481 = smul.addr %s20, 128
          %s482 = scalar_lea.hbm %s5, %s481
          %s484 = sshll.u32 %s471, 4
          %s485 = int_to_ptr.vmem [resolvable:$true] %s484
          %487 = dma.vmem_to_hbm [thread:$0]  %s485, 128, %s482, %s468
        $region48: #{hawkes_forward.1} parent=35 // pred_fallthru
          _
        // Predicated region
        $region49: #{hawkes_forward.1} parent=35 // pred_check
          %p488 = pneg %p122
        $region50: #{hawkes_forward.1} parent=35 // pred_check_branch
          %490 = sbr.rel (%p488) target = $region52
        $region51: #{hawkes_forward.1} parent=35 // pred_region
          _
        $region52: #{hawkes_forward.1} parent=35 // pred_fallthru
          _
      $region36: #{hawkes_forward.1} parent=5 // pred_fallthru
        _
      %p491 = scmp.le.s32.totalorder 2, %s15
      // Predicated region
      $region53: #{hawkes_forward.1} parent=5 // pred_check
        %p492 = pneg %p491
      $region54: #{hawkes_forward.1} parent=5 // pred_check_branch
        %494 = sbr.rel (%p492) target = $region56
      $region55: #{hawkes_forward.1} parent=5 // pred_region
        %s495 = ssub.s32 %s15, 2
        // Predicated region
        $region57: #{hawkes_forward.1} parent=55 // pred_check
          %p496 = pneg %p154
        $region58: #{hawkes_forward.1} parent=55 // pred_check_branch
          %498 = sbr.rel (%p496) target = $region60
        $region59: #{hawkes_forward.1} parent=55 // pred_region
          %s499 = sand.u32 %s139, 1
          %s500 = scalar_lea.sflag [#allocation4], %s499
          %s501 = sand.u32 %s139, 1
          %s502 = smul.addr %s501, 8
          %s503 = scalar_lea.vmem [#allocation3], %s502
          %504 = dma.done %s500, 128
        $region60: #{hawkes_forward.1} parent=55 // pred_fallthru
          _
      $region56: #{hawkes_forward.1} parent=5 // pred_fallthru
        _
    $region6: #{hawkes_forward.1} parent=1 // loop_footer
      %s19 = sadd.s32 1, %s15
    $region7: #{hawkes_forward.1} parent=1 // loop_footer_branch
      %14 = sbr.rel target = $region3
    $region8: #{hawkes_forward.1} parent=1 // loop_exit
      _
    %505 = vsyncpa [#allocation4], 1
    %s506 = scalar_lea.sflag [#allocation4], 1
    %507 = vsyncpa %s506, 1

</llo_original>
